<compile_context>
chip_gen: v7x
topology: tpu7x:2x2x1
jax: 0.10.0
libtpu: 0.0.40
codegen_flags: <defaults>
</compile_context>

<pallas_src>
import jax
import jax.numpy as jnp
from jax.experimental import pallas as pl
from jax.experimental.pallas import tpu as pltpu


def _skip_add_kernel(res_ref, cur_ref, out_ref):
    # Pure elementwise add on one VMEM tile (VPU).
    out_ref[...] = res_ref[...] + cur_ref[...]


def _target_block_bytes():
    """Per-tile byte budget, sized per TPU generation (scoped-VMEM defaults)."""
    try:
        kind = jax.devices()[0].device_kind.lower()
    except Exception:  # pragma: no cover - defensive default
        return 2 << 20
    if "v5 lite" in kind or "v5e" in kind or "v5lite" in kind:
        # 16 MiB scoped-VMEM default: 3 arrays x 2 buffers x 2 MiB = 12 MiB.
        return 2 << 20
    if "v6" in kind or "v7" in kind or "7x" in kind:
        # 32 MiB scoped-VMEM default: 3 x 2 x 4 MiB = 24 MiB live, still safe.
        return 4 << 20
    return 2 << 20  # conservative for unknown / older generations


def _choose_tile_rows(rows, target_rows, sublane):
    """Pick tile_rows: a multiple of `sublane`, <= target_rows, preferably an
    exact divisor of `rows` (no masked tail block), while leaving >=2
    (ideally >=4) grid steps so megacore sharding and pipelining have work."""
    if rows <= sublane:
        return rows  # single full-extent block (always a legal block shape)

    if rows >= 4 * sublane:
        min_steps = 4
    elif rows >= 2 * sublane:
        min_steps = 2
    else:
        min_steps = 1

    cap = (rows // min_steps) // sublane * sublane
    cap = max(sublane, min(target_rows, cap))

    # Largest exact divisor of `rows` that is a sublane multiple and <= cap.
    best = None
    d = 1
    while d * d <= rows:
        if rows % d == 0:
            for cand in (d, rows // d):
                if cand % sublane == 0 and cand <= cap:
                    if best is None or cand > best:
                        best = cand
        d += 1
    if best is not None:
        return best
    # No exact tiling exists for this row count -> accept a masked tail block.
    return cap


def _skip_connection_impl(residual, current):
    """residual + current with exact PyTorch SkipConnection semantics."""
    assert residual.shape == current.shape, "SkipConnection expects matching shapes"
    assert residual.dtype == current.dtype

    orig_shape = residual.shape
    dtype = residual.dtype
    n = residual.size
    itemsize = jnp.dtype(dtype).itemsize

    # Widest lane-dense last dim that divides n exactly (no padding copies).
    lane = None
    for cand in (512, 256, 128):
        if n % cand == 0:
            lane = cand
            break

    if lane is None:
        # Ragged tensor (rare for NCHW activations): leave the tiny/ragged
        # mem-bound add to XLA rather than paying padded copies.
        # TODO(synk): fuse into the adjacent conv/norm kernel's epilogue.
        return residual + current

    rows = n // lane
    r2 = residual.reshape(rows, lane)  # bitcast under jit, no HBM copy
    c2 = current.reshape(rows, lane)

    # dtype-aware sublane multiple: sub-32-bit dtypes pack along sublanes.
    sublane = {4: 8, 2: 16, 1: 32}.get(itemsize, 8)

    block_elems = _target_block_bytes() // itemsize
    target_rows = max(sublane, (block_elems // lane) // sublane * sublane)
    tile_rows = _choose_tile_rows(rows, target_rows, sublane)
    grid = (pl.cdiv(rows, tile_rows),)

    out2 = pl.pallas_call(
        _skip_add_kernel,
        out_shape=jax.ShapeDtypeStruct((rows, lane), dtype),
        grid_spec=pltpu.PrefetchScalarGridSpec(
            num_scalar_prefetch=0,
            grid=grid,
            in_specs=[
                pl.BlockSpec((tile_rows, lane), lambda i: (i, 0)),
                pl.BlockSpec((tile_rows, lane), lambda i: (i, 0)),
            ],
            out_specs=pl.BlockSpec((tile_rows, lane), lambda i: (i, 0)),
        ),
        compiler_params=pltpu.CompilerParams(
            dimension_semantics=("parallel",),
        ),
        cost_estimate=pl.CostEstimate(
            flops=n,
            transcendentals=0,
            bytes_accessed=3 * n * itemsize,
        ),
    )(r2, c2)

    return out2.reshape(orig_shape)


# jit so the reshape -> pallas_call -> reshape sequence stays fused and the
# reshapes are free bitcasts instead of standalone dispatched copies.
skip_connection = jax.jit(_skip_connection_impl)


if __name__ == "__main__":
    key = jax.random.PRNGKey(0)
    k1, k2 = jax.random.split(key)

    # Small NCHW inputs consistent with a decoder feature map.
    x_shape = (2, 4, 16, 16)
    residual = jax.random.normal(k1, x_shape, dtype=jnp.float32)
    current = jax.random.normal(k2, x_shape, dtype=jnp.float32)

    out = skip_connection(residual, current)
    jax.block_until_ready(out)

    ref = residual + current
    assert out.shape == ref.shape
    assert out.dtype == ref.dtype
    assert jnp.allclose(out, ref, atol=1e-6, rtol=1e-6)

    # Second check exercising the multi-step (>=4 grid steps) path.
    y_shape = (2, 8, 64, 64)
    k3, k4 = jax.random.split(k2)
    res2 = jax.random.normal(k3, y_shape, dtype=jnp.float32)
    cur2 = jax.random.normal(k4, y_shape, dtype=jnp.float32)
    out2 = skip_connection(res2, cur2)
    jax.block_until_ready(out2)
    assert jnp.allclose(out2, res2 + cur2, atol=1e-6, rtol=1e-6)

    print("KERNEL_OK")
</pallas_src>

<mosaic_0001>
module attributes {stable_mosaic.version = 11 : i64} {
  func.func @_skip_add_kernel(%arg0: i32, %arg1: memref<4x512xf32, #tpu.memory_space<vmem>>, %arg2: memref<4x512xf32, #tpu.memory_space<vmem>>, %arg3: memref<4x512xf32, #tpu.memory_space<vmem>>) attributes {dimension_semantics = [#tpu.dimension_semantics<parallel>], iteration_bounds = array<i64: 1>, scalar_prefetch = 0 : i64, scratch_operands = 0 : i64, tpu.core_type = #tpu.core_type<tc>, window_params = [{transform_indices = @transform_0, window_bounds = array<i64: 4, 512>}, {transform_indices = @transform_1, window_bounds = array<i64: 4, 512>}, {transform_indices = @transform_2, window_bounds = array<i64: 4, 512>}]} {
    %c0 = arith.constant 0 : index
    %c0_0 = arith.constant 0 : index
    %0 = vector.load %arg1[%c0, %c0_0] : memref<4x512xf32, #tpu.memory_space<vmem>>, vector<4x512xf32>
    %c0_1 = arith.constant 0 : index
    %c0_2 = arith.constant 0 : index
    %1 = vector.load %arg2[%c0_1, %c0_2] : memref<4x512xf32, #tpu.memory_space<vmem>>, vector<4x512xf32>
    %2 = arith.addf %0, %1 : vector<4x512xf32>
    %c0_3 = arith.constant 0 : index
    %c0_4 = arith.constant 0 : index
    %3 = vector.load %arg3[%c0_3, %c0_4] : memref<4x512xf32, #tpu.memory_space<vmem>>, vector<4x512xf32>
    tpu.vector_store %arg3[%c0_3, %c0_4], %2 {strides = array<i32>} : memref<4x512xf32, #tpu.memory_space<vmem>>, vector<4x512xf32>,
    return
  }
  func.func @transform_0(%arg0: i32) -> (i32, i32) {
    %c0_i32 = arith.constant 0 : i32
    %c0_i32_0 = arith.constant 0 : i32
    return %arg0, %c0_i32 : i32, i32
  }
  func.func @transform_1(%arg0: i32) -> (i32, i32) {
    %c0_i32 = arith.constant 0 : i32
    %c0_i32_0 = arith.constant 0 : i32
    return %arg0, %c0_i32 : i32, i32
  }
  func.func @transform_2(%arg0: i32) -> (i32, i32) {
    %c0_i32 = arith.constant 0 : i32
    %c0_i32_0 = arith.constant 0 : i32
    return %arg0, %c0_i32 : i32, i32
  }
}

</mosaic_0001>

<llo_original>
// kernel: _skip_connection_impl.1
$region0: #{_skip_connection_impl.1}
  #allocation0 [shape = 'u32[]', space=smem, size = 0x4, offset = 0x4, fixed_abs, tag = 'smem constant byte address 0x4 - core index']
  #allocation1 [shape = 'u32[144,128]{1,0:T(1,128)}', space=vmem, size = 0x12000, scoped, tag = 'internal scratch']
  %s0 = inlined_call_operand.vmem [shape: f32[4,512], index: 0, kind: input, shape index: {}]
  %s1 = inlined_call_operand.vmem [shape: f32[4,512], index: 1, kind: input, shape index: {}]
  %s2 = inlined_call_operand.vmem [shape: f32[4,512], index: 2, kind: output, shape index: {}]
  %s3 = sld [smem:[#allocation0]]
  $region18: #{_skip_connection_impl.1} parent=0
    _
  %s5 = ssub.s32 1, %s3
  %s6 = scalar_select 0, %s5, %s3
  // Predicated region
  $region2: #{_skip_connection_impl.1} parent=0 // pred_check
    _
  $region3: #{_skip_connection_impl.1} parent=0 // pred_check_branch
    %8 = sbr.rel (0) target = $region5
  $region4: #{_skip_connection_impl.1} parent=0 // pred_region
    _
  $region5: #{_skip_connection_impl.1} parent=0 // pred_fallthru
    _
  // Predicated region
  $region6: #{_skip_connection_impl.1} parent=0 // pred_check
    _
  $region7: #{_skip_connection_impl.1} parent=0 // pred_check_branch
    %10 = sbr.rel (0) target = $region9
  $region8: #{_skip_connection_impl.1} parent=0 // pred_region
    _
  $region9: #{_skip_connection_impl.1} parent=0 // pred_fallthru
    _
  %v11 = vld [vmem:[%s0] sm:$0xff]
  %v12 = vld [vmem:[%s0 + $0x8] sm:$0xff]
  %v13 = vld [vmem:[%s1] sm:$0xff]
  %v14 = vld [vmem:[%s1 + $0x8] sm:$0xff]
  %v15 = vadd.f32 %v11, %v13
  %v16 = vadd.f32 %v12, %v14
  %17 = vst [vmem:[%s2] sm:$0xff] %v15
  %18 = vst [vmem:[%s2 + $0x8] sm:$0xff] %v16
  // Predicated region
  $region10: #{_skip_connection_impl.1} parent=0 // pred_check
    _
  $region11: #{_skip_connection_impl.1} parent=0 // pred_check_branch
    %20 = sbr.rel (0) target = $region13
  $region12: #{_skip_connection_impl.1} parent=0 // pred_region
    _
  $region13: #{_skip_connection_impl.1} parent=0 // pred_fallthru
    _
  // Predicated region
  $region14: #{_skip_connection_impl.1} parent=0 // pred_check
    _
  $region15: #{_skip_connection_impl.1} parent=0 // pred_check_branch
    %22 = sbr.rel (0) target = $region17
  $region16: #{_skip_connection_impl.1} parent=0 // pred_region
    _
  $region17: #{_skip_connection_impl.1} parent=0 // pred_fallthru
    _

</llo_original>
